<compile_context>
chip_gen: v5e
topology: v5e:2x2
jax: 0.10.0
libtpu: 0.0.40
codegen_flags: <defaults>
</compile_context>

<pallas_src>
import jax
import jax.numpy as jnp
from jax.experimental import pallas as pl
from jax.experimental.pallas import tpu as pltpu


def _round_up(x: int, m: int) -> int:
    return ((x + m - 1) // m) * m


def _fasttext_kernel(ids_ref, table_ref, w1_ref, b1_ref, w2_ref, b2_ref, out_ref):
    # ids_ref:   (TB, S)   int32 (batch tile of token ids, streamed per grid step)
    # table_ref: (Vp, Ep)  bf16  (zero-padded embedding table, VMEM-resident)
    # w1_ref:    (Ep, Hp)  bf16   b1_ref: (1, Hp) f32
    # w2_ref:    (Hp, Cp)  bf16   b2_ref: (1, Cp) f32
    # out_ref:   (TB, Cp)  f32
    ids = ids_ref[...]
    tb, seq = ids.shape
    vocab_p = table_ref.shape[0]

    # Fused gather + mean-pool, phase 1: per-batch token counts.
    # Single hoisted 2-D iota; static (fully unrolled, S known at trace time)
    # loop over sequence positions accumulating int32 counts.  No (TB, S, Vp)
    # materialization and no cross-sublane reduce: S VPU compares + adds on a
    # (TB, Vp) tile, one float cast after the loop (v5e-friendly).
    iota_v = jax.lax.broadcasted_iota(jnp.int32, (tb, vocab_p), 1)
    counts = jnp.zeros((tb, vocab_p), jnp.int32)
    for s in range(seq):
        counts = counts + (ids[:, s:s + 1] == iota_v).astype(jnp.int32)

    # Counts <= S, so bf16 is exact for S <= 256; fall back to f32 otherwise.
    count_dtype = table_ref.dtype if seq <= 256 else jnp.float32
    counts_mm = counts.astype(count_dtype)

    # Phase 2: counts @ table on the MXU (bf16 in, f32 accumulate).
    pooled = jnp.dot(counts_mm, table_ref[...],
                     preferred_element_type=jnp.float32)           # (TB, Ep) f32
    # Mean factor applied AFTER the matmul: scales (TB, Ep) instead of (TB, Vp)
    # and keeps the count matrix exact.
    pooled = pooled * (1.0 / float(seq))

    # fc1 + ReLU (bias row broadcast over the batch-tile sublanes).
    h = jnp.dot(pooled.astype(w1_ref.dtype), w1_ref[...],
                preferred_element_type=jnp.float32) + b1_ref[...]
    h = jnp.maximum(h, 0.0)

    # fc2
    o = jnp.dot(h.astype(w2_ref.dtype), w2_ref[...],
                preferred_element_type=jnp.float32) + b2_ref[...]
    out_ref[...] = o.astype(out_ref.dtype)


def prepare_params(params, *, param_dtype=jnp.bfloat16):
    """Pad + cast the parameters ONCE (init / load time) so the per-call forward
    path only pads the integer ids.  Padded rows/cols are zero -> exact."""
    table = params["embedding_topics"]
    w1, b1 = params["w1"], params["b1"]
    w2, b2 = params["w2"], params["b2"]
    V, E = table.shape
    H = w1.shape[1]
    C = w2.shape[1]
    Vp, Ep, Hp, Cp = (_round_up(d, 128) for d in (V, E, H, C))

    f32 = jnp.float32
    return {
        "table_p": jnp.pad(table.astype(f32), ((0, Vp - V), (0, Ep - E))).astype(param_dtype),
        "w1_p": jnp.pad(w1.astype(f32), ((0, Ep - E), (0, Hp - H))).astype(param_dtype),
        "b1_p": jnp.pad(b1.astype(f32), ((0, 0), (0, Hp - H))),            # bias stays f32
        "w2_p": jnp.pad(w2.astype(f32), ((0, Hp - H), (0, Cp - C))).astype(param_dtype),
        "b2_p": jnp.pad(b2.astype(f32), ((0, 0), (0, Cp - C))),            # bias stays f32
        "dims": (V, E, H, C),
        "padded_dims": (Vp, Ep, Hp, Cp),
    }


def fasttext_pallas(ids, prepared, *, batch_tile=None):
    """ids: (B, S) int32 token ids.  Returns (B, C) f32 logits."""
    B, S = ids.shape
    V, E, H, C = prepared["dims"]
    Vp, Ep, Hp, Cp = prepared["padded_dims"]
    table_p = prepared["table_p"]
    w1_p, b1_p = prepared["w1_p"], prepared["b1_p"]
    w2_p, b2_p = prepared["w2_p"], prepared["b2_p"]

    # Batch tile = MXU M-dim / pipelining unit.  Large batches use 256-row tiles
    # (amortizes the ~0.35us per-grid-step overhead) while keeping >= 2 grid
    # steps so ("parallel",) can shard across the two TensorCores on v7x.
    if batch_tile is None:
        batch_tile = _round_up(B, 8) if B <= 256 else 256
    TB = batch_tile
    Bp = _round_up(B, TB)

    # Padded batch rows carry token id 0: they gather real table row 0 and
    # produce garbage logits that are sliced off below (harmless; wasted MXU
    # rows only).  Note: out-of-range ids map to zero-padded table rows instead
    # of raising, unlike nn.Embedding.
    ids_p = jnp.pad(ids.astype(jnp.int32), ((0, Bp - B), (0, 0)))

    grid = (Bp // TB,)

    flops = 2 * Bp * (Vp * Ep + Ep * Hp + Hp * Cp)
    bytes_accessed = (ids_p.size * 4 + Bp * Cp * 4
                      + table_p.size * table_p.dtype.itemsize
                      + w1_p.size * w1_p.dtype.itemsize + b1_p.size * 4
                      + w2_p.size * w2_p.dtype.itemsize + b2_p.size * 4)

    out_p = pl.pallas_call(
        _fasttext_kernel,
        out_shape=jax.ShapeDtypeStruct((Bp, Cp), jnp.float32),
        grid=grid,
        in_specs=[
            pl.BlockSpec((TB, S), lambda i: (i, 0)),     # ids: streamed per batch tile
            pl.BlockSpec((Vp, Ep), lambda i: (0, 0)),    # embedding table: VMEM-resident
            pl.BlockSpec((Ep, Hp), lambda i: (0, 0)),    # w1
            pl.BlockSpec((1, Hp), lambda i: (0, 0)),     # b1
            pl.BlockSpec((Hp, Cp), lambda i: (0, 0)),    # w2
            pl.BlockSpec((1, Cp), lambda i: (0, 0)),     # b2
        ],
        out_specs=pl.BlockSpec((TB, Cp), lambda i: (i, 0)),
        compiler_params=pltpu.CompilerParams(
            dimension_semantics=("parallel",),
            vmem_limit_bytes=64 * 1024 * 1024,
        ),
        cost_estimate=pl.CostEstimate(flops=flops, transcendentals=0,
                                      bytes_accessed=bytes_accessed),
    )(ids_p, table_p, w1_p, b1_p, w2_p, b2_p)

    # Strip batch / class padding.
    return out_p[:B, :C]


def model_forward(x, prepared):
    """x is a length-5 sequence; only x[4] (topic token ids, (B, S)) is consumed,
    matching the PyTorch forward's `if len(x) == 5:` branch.  Dropout is identity
    (inference); torch.cat((emb,), -1) is a no-op."""
    assert len(x) == 5
    return fasttext_pallas(x[4], prepared)


def init_params(key, vocab_topics, topics, hidden_size, num_classes):
    k0, k1, k2, k3, k4 = jax.random.split(key, 5)
    return {
        # nn.Embedding.from_pretrained(config.embedding_pretrained_topics)
        "embedding_topics": jax.random.normal(k0, (vocab_topics, topics), jnp.float32) * 0.1,
        # fc1: Linear(topics, hidden_size), stored as (in, out) for the kernel
        "w1": jax.random.normal(k1, (topics, hidden_size), jnp.float32) * 0.1,
        "b1": jax.random.normal(k2, (1, hidden_size), jnp.float32) * 0.01,
        # fc2: Linear(hidden_size, num_classes)
        "w2": jax.random.normal(k3, (hidden_size, num_classes), jnp.float32) * 0.1,
        "b2": jax.random.normal(k4, (1, num_classes), jnp.float32) * 0.01,
    }


def reference_forward(x, params):
    ids = x[4]
    emb = jnp.take(params["embedding_topics"], ids, axis=0)   # (B, S, E)
    pooled = jnp.mean(emb, axis=1)
    h = jnp.maximum(pooled @ params["w1"] + params["b1"], 0.0)
    return h @ params["w2"] + params["b2"]


if __name__ == "__main__":
    # Small config consistent with the module:
    #   config.topics = 32 (embedding dim == fc1 input), hidden_size = 32, num_classes = 4
    B, S = 2, 8
    VOCAB_TOPICS, TOPICS, HIDDEN, NUM_CLASSES = 50, 32, 32, 4

    key = jax.random.PRNGKey(0)
    pkey, ikey = jax.random.split(key)
    params = init_params(pkey, VOCAB_TOPICS, TOPICS, HIDDEN, NUM_CLASSES)
    prepared = prepare_params(params)   # pad + bf16-cast once, not per forward call

    # Build the 5-element input; only x[4] (topic ids) is consumed by forward().
    topic_ids = jax.random.randint(ikey, (B, S), 0, VOCAB_TOPICS, dtype=jnp.int32)
    dummy = jnp.zeros((B, S), dtype=jnp.int32)
    x = (dummy, dummy, dummy, dummy, topic_ids)

    out = model_forward(x, prepared)
    out = jax.block_until_ready(out)

    ref = reference_forward(x, params)
    assert out.shape == (B, NUM_CLASSES)
    # Tolerance accounts for bf16 storage of table/w1/w2 (counts stay exact
    # integers; accumulation is f32 on the MXU).
    assert jnp.allclose(out, ref, atol=1e-2, rtol=1e-2), (
        f"max abs err = {jnp.max(jnp.abs(out - ref))}")

    print("KERNEL_OK")
</pallas_src>

<mosaic_0001>
module attributes {stable_mosaic.version = 11 : i64} {
  func.func @_fasttext_kernel(%arg0: i32, %arg1: memref<8x8xi32, #tpu.memory_space<vmem>>, %arg2: memref<128x128xbf16, #tpu.memory_space<vmem>>, %arg3: memref<128x128xbf16, #tpu.memory_space<vmem>>, %arg4: memref<1x128xf32, #tpu.memory_space<vmem>>, %arg5: memref<128x128xbf16, #tpu.memory_space<vmem>>, %arg6: memref<1x128xf32, #tpu.memory_space<vmem>>, %arg7: memref<8x128xf32, #tpu.memory_space<vmem>>) attributes {dimension_semantics = [#tpu.dimension_semantics<parallel>], iteration_bounds = array<i64: 1>, scalar_prefetch = 0 : i64, scratch_operands = 0 : i64, tpu.core_type = #tpu.core_type<tc>, window_params = [{transform_indices = @transform_0, window_bounds = array<i64: 8, 8>}, {pipeline_mode = #tpu.pipeline_mode<synchronous>, transform_indices = @transform_1, window_bounds = array<i64: 128, 128>}, {pipeline_mode = #tpu.pipeline_mode<synchronous>, transform_indices = @transform_2, window_bounds = array<i64: 128, 128>}, {pipeline_mode = #tpu.pipeline_mode<synchronous>, transform_indices = @transform_3, window_bounds = array<i64: 1, 128>}, {pipeline_mode = #tpu.pipeline_mode<synchronous>, transform_indices = @transform_4, window_bounds = array<i64: 128, 128>}, {pipeline_mode = #tpu.pipeline_mode<synchronous>, transform_indices = @transform_5, window_bounds = array<i64: 1, 128>}, {transform_indices = @transform_6, window_bounds = array<i64: 8, 128>}]} {
    %c0 = arith.constant 0 : index
    %c0_0 = arith.constant 0 : index
    %0 = vector.load %arg1[%c0, %c0_0] : memref<8x8xi32, #tpu.memory_space<vmem>>, vector<8x8xi32>
    %1 = tpu.iota {dimensions = array<i32: 1>} : vector<8x128xi32>
    %c0_i32 = arith.constant 0 : i32
    %2 = vector.broadcast %c0_i32 : i32 to vector<8x128xi32>
    %3 = vector.extract_strided_slice %0 {offsets = [0, 0], sizes = [8, 1], strides = [1, 1]} : vector<8x8xi32> to vector<8x1xi32>
    %4 = vector.broadcast %3 : vector<8x1xi32> to vector<8x128xi32>
    %5 = arith.cmpi eq, %4, %1 : vector<8x128xi32>
    %6 = arith.extui %5 : vector<8x128xi1> to vector<8x128xi32>
    %7 = arith.addi %2, %6 : vector<8x128xi32>
    %8 = vector.extract_strided_slice %0 {offsets = [0, 1], sizes = [8, 1], strides = [1, 1]} : vector<8x8xi32> to vector<8x1xi32>
    %9 = vector.broadcast %8 : vector<8x1xi32> to vector<8x128xi32>
    %10 = arith.cmpi eq, %9, %1 : vector<8x128xi32>
    %11 = arith.extui %10 : vector<8x128xi1> to vector<8x128xi32>
    %12 = arith.addi %7, %11 : vector<8x128xi32>
    %13 = vector.extract_strided_slice %0 {offsets = [0, 2], sizes = [8, 1], strides = [1, 1]} : vector<8x8xi32> to vector<8x1xi32>
    %14 = vector.broadcast %13 : vector<8x1xi32> to vector<8x128xi32>
    %15 = arith.cmpi eq, %14, %1 : vector<8x128xi32>
    %16 = arith.extui %15 : vector<8x128xi1> to vector<8x128xi32>
    %17 = arith.addi %12, %16 : vector<8x128xi32>
    %18 = vector.extract_strided_slice %0 {offsets = [0, 3], sizes = [8, 1], strides = [1, 1]} : vector<8x8xi32> to vector<8x1xi32>
    %19 = vector.broadcast %18 : vector<8x1xi32> to vector<8x128xi32>
    %20 = arith.cmpi eq, %19, %1 : vector<8x128xi32>
    %21 = arith.extui %20 : vector<8x128xi1> to vector<8x128xi32>
    %22 = arith.addi %17, %21 : vector<8x128xi32>
    %23 = vector.extract_strided_slice %0 {offsets = [0, 4], sizes = [8, 1], strides = [1, 1]} : vector<8x8xi32> to vector<8x1xi32>
    %24 = vector.broadcast %23 : vector<8x1xi32> to vector<8x128xi32>
    %25 = arith.cmpi eq, %24, %1 : vector<8x128xi32>
    %26 = arith.extui %25 : vector<8x128xi1> to vector<8x128xi32>
    %27 = arith.addi %22, %26 : vector<8x128xi32>
    %28 = vector.extract_strided_slice %0 {offsets = [0, 5], sizes = [8, 1], strides = [1, 1]} : vector<8x8xi32> to vector<8x1xi32>
    %29 = vector.broadcast %28 : vector<8x1xi32> to vector<8x128xi32>
    %30 = arith.cmpi eq, %29, %1 : vector<8x128xi32>
    %31 = arith.extui %30 : vector<8x128xi1> to vector<8x128xi32>
    %32 = arith.addi %27, %31 : vector<8x128xi32>
    %33 = vector.extract_strided_slice %0 {offsets = [0, 6], sizes = [8, 1], strides = [1, 1]} : vector<8x8xi32> to vector<8x1xi32>
    %34 = vector.broadcast %33 : vector<8x1xi32> to vector<8x128xi32>
    %35 = arith.cmpi eq, %34, %1 : vector<8x128xi32>
    %36 = arith.extui %35 : vector<8x128xi1> to vector<8x128xi32>
    %37 = arith.addi %32, %36 : vector<8x128xi32>
    %38 = vector.extract_strided_slice %0 {offsets = [0, 7], sizes = [8, 1], strides = [1, 1]} : vector<8x8xi32> to vector<8x1xi32>
    %39 = vector.broadcast %38 : vector<8x1xi32> to vector<8x128xi32>
    %40 = arith.cmpi eq, %39, %1 : vector<8x128xi32>
    %41 = arith.extui %40 : vector<8x128xi1> to vector<8x128xi32>
    %42 = arith.addi %37, %41 : vector<8x128xi32>
    %43 = arith.sitofp %42 : vector<8x128xi32> to vector<8x128xbf16>
    %c0_1 = arith.constant 0 : index
    %c0_2 = arith.constant 0 : index
    %44 = vector.load %arg2[%c0_1, %c0_2] : memref<128x128xbf16, #tpu.memory_space<vmem>>, vector<128x128xbf16>
    %cst = arith.constant dense<0.000000e+00> : vector<8x128xf32>
    %45 = tpu.matmul %43, %44, %cst {dimension_numbers = #tpu.dot_dimension_numbers<[1], [0], [0], [1], [0, 0, 1, 1], [], []>} : vector<8x128xbf16>, vector<128x128xbf16>, vector<8x128xf32> -> vector<8x128xf32>
    %cst_3 = arith.constant 1.250000e-01 : f32
    %46 = vector.broadcast %cst_3 : f32 to vector<8x128xf32>
    %47 = arith.mulf %45, %46 : vector<8x128xf32>
    %48 = arith.truncf %47 : vector<8x128xf32> to vector<8x128xbf16>
    %c0_4 = arith.constant 0 : index
    %c0_5 = arith.constant 0 : index
    %49 = vector.load %arg3[%c0_4, %c0_5] : memref<128x128xbf16, #tpu.memory_space<vmem>>, vector<128x128xbf16>
    %cst_6 = arith.constant dense<0.000000e+00> : vector<8x128xf32>
    %50 = tpu.matmul %48, %49, %cst_6 {dimension_numbers = #tpu.dot_dimension_numbers<[1], [0], [0], [1], [0, 0, 1, 1], [], []>} : vector<8x128xbf16>, vector<128x128xbf16>, vector<8x128xf32> -> vector<8x128xf32>
    %c0_7 = arith.constant 0 : index
    %c0_8 = arith.constant 0 : index
    %51 = vector.load %arg4[%c0_7, %c0_8] : memref<1x128xf32, #tpu.memory_space<vmem>>, vector<1x128xf32>
    %52 = vector.broadcast %51 : vector<1x128xf32> to vector<8x128xf32>
    %53 = arith.addf %50, %52 : vector<8x128xf32>
    %cst_9 = arith.constant 0.000000e+00 : f32
    %54 = vector.broadcast %cst_9 : f32 to vector<8x128xf32>
    %55 = arith.maximumf %53, %54 : vector<8x128xf32>
    %56 = arith.truncf %55 : vector<8x128xf32> to vector<8x128xbf16>
    %c0_10 = arith.constant 0 : index
    %c0_11 = arith.constant 0 : index
    %57 = vector.load %arg5[%c0_10, %c0_11] : memref<128x128xbf16, #tpu.memory_space<vmem>>, vector<128x128xbf16>
    %cst_12 = arith.constant dense<0.000000e+00> : vector<8x128xf32>
    %58 = tpu.matmul %56, %57, %cst_12 {dimension_numbers = #tpu.dot_dimension_numbers<[1], [0], [0], [1], [0, 0, 1, 1], [], []>} : vector<8x128xbf16>, vector<128x128xbf16>, vector<8x128xf32> -> vector<8x128xf32>
    %c0_13 = arith.constant 0 : index
    %c0_14 = arith.constant 0 : index
    %59 = vector.load %arg6[%c0_13, %c0_14] : memref<1x128xf32, #tpu.memory_space<vmem>>, vector<1x128xf32>
    %60 = vector.broadcast %59 : vector<1x128xf32> to vector<8x128xf32>
    %61 = arith.addf %58, %60 : vector<8x128xf32>
    %c0_15 = arith.constant 0 : index
    %c0_16 = arith.constant 0 : index
    %62 = vector.load %arg7[%c0_15, %c0_16] : memref<8x128xf32, #tpu.memory_space<vmem>>, vector<8x128xf32>
    tpu.vector_store %arg7[%c0_15, %c0_16], %61 {strides = array<i32>} : memref<8x128xf32, #tpu.memory_space<vmem>>, vector<8x128xf32>,
    return
  }
  func.func @transform_0(%arg0: i32) -> (i32, i32) {
    %c0_i32 = arith.constant 0 : i32
    %c0_i32_0 = arith.constant 0 : i32
    return %arg0, %c0_i32 : i32, i32
  }
  func.func @transform_1(%arg0: i32) -> (i32, i32) {
    %c0_i32 = arith.constant 0 : i32
    %c0_i32_0 = arith.constant 0 : i32
    %c0_i32_1 = arith.constant 0 : i32
    return %c0_i32, %c0_i32_0 : i32, i32
  }
  func.func @transform_2(%arg0: i32) -> (i32, i32) {
    %c0_i32 = arith.constant 0 : i32
    %c0_i32_0 = arith.constant 0 : i32
    %c0_i32_1 = arith.constant 0 : i32
    return %c0_i32, %c0_i32_0 : i32, i32
  }
  func.func @transform_3(%arg0: i32) -> (i32, i32) {
    %c0_i32 = arith.constant 0 : i32
    %c0_i32_0 = arith.constant 0 : i32
    %c0_i32_1 = arith.constant 0 : i32
    return %c0_i32, %c0_i32_0 : i32, i32
  }
  func.func @transform_4(%arg0: i32) -> (i32, i32) {
    %c0_i32 = arith.constant 0 : i32
    %c0_i32_0 = arith.constant 0 : i32
    %c0_i32_1 = arith.constant 0 : i32
    return %c0_i32, %c0_i32_0 : i32, i32
  }
  func.func @transform_5(%arg0: i32) -> (i32, i32) {
    %c0_i32 = arith.constant 0 : i32
    %c0_i32_0 = arith.constant 0 : i32
    %c0_i32_1 = arith.constant 0 : i32
    return %c0_i32, %c0_i32_0 : i32, i32
  }
  func.func @transform_6(%arg0: i32) -> (i32, i32) {
    %c0_i32 = arith.constant 0 : i32
    %c0_i32_0 = arith.constant 0 : i32
    return %arg0, %c0_i32 : i32, i32
  }
}

</mosaic_0001>

<llo_original>
// kernel: tpu_custom_call.1
$region0: #{tpu_custom_call.1}
  #allocation0 [shape = 'u32[]', space=smem, size = 0x4, offset = 0x4, fixed_abs, tag = 'smem constant byte address 0x4 - core index']
  #allocation1 [shape = 'u32[72,128]{1,0:T(1,128)}', space=vmem, size = 0x9000, scoped, tag = 'internal scratch']
  %s0 = inlined_call_operand.hbm [shape: s32[8,8], index: 0, kind: input, shape index: {}]
  %s1 = inlined_call_operand.hbm [shape: bf16[128,128], index: 1, kind: input, shape index: {}]
  %s2 = inlined_call_operand.hbm [shape: bf16[128,128], index: 2, kind: input, shape index: {}]
  %s3 = inlined_call_operand.vmem [shape: f32[1,128], index: 3, kind: input, shape index: {}]
  %s4 = inlined_call_operand.hbm [shape: bf16[128,128], index: 4, kind: input, shape index: {}]
  %s5 = inlined_call_operand.vmem [shape: f32[1,128], index: 5, kind: input, shape index: {}]
  %s6 = inlined_call_operand.hbm [shape: f32[8,128], index: 6, kind: output, shape index: {}]
  %s7 = sld [smem:[#allocation0]]
  $region50: #{tpu_custom_call.1} parent=0
    _
  %s9 = ssub.s32 1, %s7
  %s10 = scalar_select 0, %s9, %s7
  $region1: #{tpu_custom_call.1} parent=0
    #allocation2 [shape = 'u8[4096]{0}', space=vmem, size = 0x1000, scoped, tag = 'input window, operand 0, single buffered']
    #allocation3 [shape = 's32[1]{0}', space=sflag, size = 0x4, scoped, tag = 'scoped memory for tpu_custom_call.1']
    #allocation4 [shape = 's32[1]{0}', space=sflag, size = 0x4, scoped, tag = 'scoped memory for tpu_custom_call.1']
    #allocation5 [shape = 'u8[32768]{0}', space=vmem, size = 0x8000, scoped, tag = 'input window, operand 1, single buffered']
    #allocation6 [shape = 's32[1]{0}', space=sflag, size = 0x4, scoped, tag = 'scoped memory for tpu_custom_call.1']
    #allocation7 [shape = 'u8[32768]{0}', space=vmem, size = 0x8000, scoped, tag = 'input window, operand 2, single buffered']
    #allocation8 [shape = 'u8[32768]{0}', space=vmem, size = 0x8000, scoped, tag = 'input window, operand 4, single buffered']
    #allocation9 [shape = 's32[1]{0}', space=sflag, size = 0x4, scoped, tag = 'scoped memory for tpu_custom_call.1']
    #allocation10 [shape = 'u8[4096]{0}', space=vmem, size = 0x1000, scoped, tag = 'output window, operand 0, single buffered']
    %11 = vsyncpa [#allocation3], 0
    %12 = vsyncpa [#allocation6], 0
    %13 = vsyncpa [#allocation9], 0
    %14 = vsyncpa [#allocation4], 0
    // Predicated region
    $region2: #{tpu_custom_call.1} parent=1 // pred_check
      _
    $region3: #{tpu_custom_call.1} parent=1 // pred_check_branch
      %16 = sbr.rel (0) target = $region5
    $region4: #{tpu_custom_call.1} parent=1 // pred_region
      %18 = vsyncadd [#allocation3], 0
      %s20 = sshll.u32 %s0, 4
      %s21 = int_to_ptr.hbm [resolvable:$true] %s20
      %s22 = sshll.u32 [#allocation2], 4
      %s23 = int_to_ptr.vmem [resolvable:$true] %s22
      %25 = dma.hbm_to_vmem [thread:$0]  %s21, 128, %s23, [#allocation3]
    $region5: #{tpu_custom_call.1} parent=1 // pred_fallthru
      _
    // Predicated region
    $region6: #{tpu_custom_call.1} parent=1 // pred_check
      _
    $region7: #{tpu_custom_call.1} parent=1 // pred_check_branch
      %27 = sbr.rel (0) target = $region9
    $region8: #{tpu_custom_call.1} parent=1 // pred_region
      %29 = vsyncadd [#allocation6], 0
      %s30 = sshll.u32 %s1, 4
      %s31 = int_to_ptr.hbm [resolvable:$true] %s30
      %s32 = sshll.u32 [#allocation5], 4
      %s33 = int_to_ptr.vmem [resolvable:$true] %s32
      %38 = dma.hbm_to_vmem [thread:$0]  %s31, 1024, %s33, [#allocation6], 64, 64, 4
    $region9: #{tpu_custom_call.1} parent=1 // pred_fallthru
      _
    // Predicated region
    $region10: #{tpu_custom_call.1} parent=1 // pred_check
      _
    $region11: #{tpu_custom_call.1} parent=1 // pred_check_branch
      %40 = sbr.rel (0) target = $region13
    $region12: #{tpu_custom_call.1} parent=1 // pred_region
      %42 = vsyncadd [#allocation6], 0
      %s43 = sshll.u32 %s2, 4
      %s44 = int_to_ptr.hbm [resolvable:$true] %s43
      %s45 = sshll.u32 [#allocation7], 4
      %s46 = int_to_ptr.vmem [resolvable:$true] %s45
      %51 = dma.hbm_to_vmem [thread:$0]  %s44, 1024, %s46, [#allocation6], 64, 64, 4
    $region13: #{tpu_custom_call.1} parent=1 // pred_fallthru
      _
    // Predicated region
    $region14: #{tpu_custom_call.1} parent=1 // pred_check
      _
    $region15: #{tpu_custom_call.1} parent=1 // pred_check_branch
      %53 = sbr.rel (0) target = $region17
    $region16: #{tpu_custom_call.1} parent=1 // pred_region
      _
    $region17: #{tpu_custom_call.1} parent=1 // pred_fallthru
      _
    // Predicated region
    $region18: #{tpu_custom_call.1} parent=1 // pred_check
      _
    $region19: #{tpu_custom_call.1} parent=1 // pred_check_branch
      %55 = sbr.rel (0) target = $region21
    $region20: #{tpu_custom_call.1} parent=1 // pred_region
      %57 = vsyncadd [#allocation9], 0
      %s58 = sshll.u32 %s4, 4
      %s59 = int_to_ptr.hbm [resolvable:$true] %s58
      %s60 = sshll.u32 [#allocation8], 4
      %s61 = int_to_ptr.vmem [resolvable:$true] %s60
      %66 = dma.hbm_to_vmem [thread:$0]  %s59, 1024, %s61, [#allocation9], 64, 64, 4
    $region21: #{tpu_custom_call.1} parent=1 // pred_fallthru
      _
    // Predicated region
    $region22: #{tpu_custom_call.1} parent=1 // pred_check
      _
    $region23: #{tpu_custom_call.1} parent=1 // pred_check_branch
      %68 = sbr.rel (0) target = $region25
    $region24: #{tpu_custom_call.1} parent=1 // pred_region
      _
    $region25: #{tpu_custom_call.1} parent=1 // pred_fallthru
      _
    // Predicated region
    $region26: #{tpu_custom_call.1} parent=1 // pred_check
      _
    $region27: #{tpu_custom_call.1} parent=1 // pred_check_branch
      %70 = sbr.rel (0) target = $region29
    $region28: #{tpu_custom_call.1} parent=1 // pred_region
      %72 = dma.done [#allocation3], 128
    $region29: #{tpu_custom_call.1} parent=1 // pred_fallthru
      _
    // Predicated region
    $region30: #{tpu_custom_call.1} parent=1 // pred_check
      _
    $region31: #{tpu_custom_call.1} parent=1 // pred_check_branch
      %74 = sbr.rel (0) target = $region33
    $region32: #{tpu_custom_call.1} parent=1 // pred_region
      %76 = dma.done [#allocation6], 1024
    $region33: #{tpu_custom_call.1} parent=1 // pred_fallthru
      _
    // Predicated region
    $region34: #{tpu_custom_call.1} parent=1 // pred_check
      _
    $region35: #{tpu_custom_call.1} parent=1 // pred_check_branch
      %78 = sbr.rel (0) target = $region37
    $region36: #{tpu_custom_call.1} parent=1 // pred_region
      %80 = dma.done [#allocation6], 1024
    $region37: #{tpu_custom_call.1} parent=1 // pred_fallthru
      _
    // Predicated region
    $region38: #{tpu_custom_call.1} parent=1 // pred_check
      _
    $region39: #{tpu_custom_call.1} parent=1 // pred_check_branch
      %82 = sbr.rel (0) target = $region41
    $region40: #{tpu_custom_call.1} parent=1 // pred_region
      %84 = dma.done [#allocation9], 1024
    $region41: #{tpu_custom_call.1} parent=1 // pred_fallthru
      _
    %v85 = vld [vmem:[#allocation2] sm:$0xff]
    %v86 = vlaneseq
    %v87 = vand.u32 %v86, 127
    %88 = vset.pattern.permute.xlu0 0
    %89 = vperm.xlu0 %88, %v85
    %v90 = vpop.permute.xlu0 %89
    %vm91 = vcmp.eq.s32.totalorder %v90, %v87
    %v92 = vsel %vm91, 1, 0
    %93 = vset.pattern.permute.xlu0 1
    %94 = vperm.xlu0 %93, %v85
    %v95 = vpop.permute.xlu0 %94
    %vm96 = vcmp.eq.s32.totalorder %v95, %v87
    %v97 = vsel %vm96, 1, 0
    %v98 = vadd.s32 %v92, %v97
    %99 = vset.pattern.permute.xlu0 2
    %100 = vperm.xlu0 %99, %v85
    %v101 = vpop.permute.xlu0 %100
    %vm102 = vcmp.eq.s32.totalorder %v101, %v87
    %v103 = vsel %vm102, 1, 0
    %v104 = vadd.s32 %v98, %v103
    %105 = vset.pattern.permute.xlu0 3
    %106 = vperm.xlu0 %105, %v85
    %v107 = vpop.permute.xlu0 %106
    %vm108 = vcmp.eq.s32.totalorder %v107, %v87
    %v109 = vsel %vm108, 1, 0
    %v110 = vadd.s32 %v104, %v109
    %111 = vset.pattern.permute.xlu0 4
    %112 = vperm.xlu0 %111, %v85
    %v113 = vpop.permute.xlu0 %112
    %vm114 = vcmp.eq.s32.totalorder %v113, %v87
    %v115 = vsel %vm114, 1, 0
    %v116 = vadd.s32 %v110, %v115
    %117 = vset.pattern.permute.xlu0 5
    %118 = vperm.xlu0 %117, %v85
    %v119 = vpop.permute.xlu0 %118
    %vm120 = vcmp.eq.s32.totalorder %v119, %v87
    %v121 = vsel %vm120, 1, 0
    %v122 = vadd.s32 %v116, %v121
    %123 = vset.pattern.permute.xlu0 6
    %124 = vperm.xlu0 %123, %v85
    %v125 = vpop.permute.xlu0 %124
    %vm126 = vcmp.eq.s32.totalorder %v125, %v87
    %v127 = vsel %vm126, 1, 0
    %v128 = vadd.s32 %v122, %v127
    %129 = vset.pattern.permute.xlu0 7
    %130 = vperm.xlu0 %129, %v85
    %v131 = vpop.permute.xlu0 %130
    %vm132 = vcmp.eq.s32.totalorder %v131, %v87
    %v133 = vsel %vm132, 1, 0
    %v134 = vadd.s32 %v128, %v133
    %v135 = vcvt.s32.f32 %v134
    %v136 = vpack.c.bf16 %v135, %v135
    %v137 = vld [vmem:[#allocation5] sm:$0xf]
    %v138 = vld [vmem:[#allocation5 + $0x4] sm:$0xf]
    %v139 = vld [vmem:[#allocation5 + $0x8] sm:$0xf]
    %v140 = vld [vmem:[#allocation5 + $0xc] sm:$0xf]
    %v141 = vld [vmem:[#allocation5 + $0x10] sm:$0xf]
    %v142 = vld [vmem:[#allocation5 + $0x14] sm:$0xf]
    %v143 = vld [vmem:[#allocation5 + $0x18] sm:$0xf]
    %v144 = vld [vmem:[#allocation5 + $0x1c] sm:$0xf]
    %v145 = vld [vmem:[#allocation5 + $0x20] sm:$0xf]
    %v146 = vld [vmem:[#allocation5 + $0x24] sm:$0xf]
    %v147 = vld [vmem:[#allocation5 + $0x28] sm:$0xf]
    %v148 = vld [vmem:[#allocation5 + $0x2c] sm:$0xf]
    %v149 = vld [vmem:[#allocation5 + $0x30] sm:$0xf]
    %v150 = vld [vmem:[#allocation5 + $0x34] sm:$0xf]
    %v151 = vld [vmem:[#allocation5 + $0x38] sm:$0xf]
    %v152 = vld [vmem:[#allocation5 + $0x3c] sm:$0xf]
    %v169 = vunpack.c.l.b16 %v137
    %v170 = vunpack.c.l.b16 %v138
    %v171 = vunpack.c.l.b16 %v139
    %v172 = vunpack.c.l.b16 %v140
    %v173 = vunpack.c.l.b16 %v141
    %v174 = vunpack.c.l.b16 %v142
    %v175 = vunpack.c.l.b16 %v143
    %v176 = vunpack.c.l.b16 %v144
    %v177 = vunpack.c.l.b16 %v145
    %v178 = vunpack.c.l.b16 %v146
    %v179 = vunpack.c.l.b16 %v147
    %v180 = vunpack.c.l.b16 %v148
    %v181 = vunpack.c.l.b16 %v149
    %v182 = vunpack.c.l.b16 %v150
    %v183 = vunpack.c.l.b16 %v151
    %v184 = vunpack.c.l.b16 %v152
    %v185 = vpack.c.b16 %v170, %v169
    %v186 = vpack.c.b16 %v172, %v171
    %v187 = vpack.c.b16 %v174, %v173
    %v188 = vpack.c.b16 %v176, %v175
    %v189 = vpack.c.b16 %v178, %v177
    %v190 = vpack.c.b16 %v180, %v179
    %v191 = vpack.c.b16 %v182, %v181
    %v192 = vpack.c.b16 %v184, %v183
    %201 = vmatpush.bf16.msra.mxu0 %v192
    %202 = vmatpush.bf16.msra.mxu0 %v191
    %203 = vmatpush.bf16.msra.mxu0 %v190
    %204 = vmatpush.bf16.msra.mxu0 %v189
    %205 = vmatpush.bf16.msra.mxu0 %v188
    %206 = vmatpush.bf16.msra.mxu0 %v187
    %207 = vmatpush.bf16.msra.mxu0 %v186
    %208 = vmatpush.bf16.msra.mxu0 %v185
    %209 = vmatmul.bf16.gmra.mxu0 %v136
    %v210 = vpop.f32.mrf.mxu0
    %v211 = vadd.f32 0.0, %v210
    %v212 = vpop.f32.mrf.mxu0
    %213 = vdwg.mxu0
    %v214 = vmul.f32 %v211, 0.125
    %v215 = vpack.c.bf16 %v214, %v214
    %v216 = vld [vmem:[#allocation7] sm:$0xf]
    %v217 = vld [vmem:[#allocation7 + $0x4] sm:$0xf]
    %v218 = vld [vmem:[#allocation7 + $0x8] sm:$0xf]
    %v219 = vld [vmem:[#allocation7 + $0xc] sm:$0xf]
    %v220 = vld [vmem:[#allocation7 + $0x10] sm:$0xf]
    %v221 = vld [vmem:[#allocation7 + $0x14] sm:$0xf]
    %v222 = vld [vmem:[#allocation7 + $0x18] sm:$0xf]
    %v223 = vld [vmem:[#allocation7 + $0x1c] sm:$0xf]
    %v224 = vld [vmem:[#allocation7 + $0x20] sm:$0xf]
    %v225 = vld [vmem:[#allocation7 + $0x24] sm:$0xf]
    %v226 = vld [vmem:[#allocation7 + $0x28] sm:$0xf]
    %v227 = vld [vmem:[#allocation7 + $0x2c] sm:$0xf]
    %v228 = vld [vmem:[#allocation7 + $0x30] sm:$0xf]
    %v229 = vld [vmem:[#allocation7 + $0x34] sm:$0xf]
    %v230 = vld [vmem:[#allocation7 + $0x38] sm:$0xf]
    %v231 = vld [vmem:[#allocation7 + $0x3c] sm:$0xf]
    %v232 = vld [vmem:[%s3] sm:$0x1]
    %v234 = vperm.slane %v232, 0
    %v252 = vunpack.c.l.b16 %v216
    %v253 = vunpack.c.l.b16 %v217
    %v254 = vunpack.c.l.b16 %v218
    %v255 = vunpack.c.l.b16 %v219
    %v256 = vunpack.c.l.b16 %v220
    %v257 = vunpack.c.l.b16 %v221
    %v258 = vunpack.c.l.b16 %v222
    %v259 = vunpack.c.l.b16 %v223
    %v260 = vunpack.c.l.b16 %v224
    %v261 = vunpack.c.l.b16 %v225
    %v262 = vunpack.c.l.b16 %v226
    %v263 = vunpack.c.l.b16 %v227
    %v264 = vunpack.c.l.b16 %v228
    %v265 = vunpack.c.l.b16 %v229
    %v266 = vunpack.c.l.b16 %v230
    %v267 = vunpack.c.l.b16 %v231
    %v268 = vpack.c.b16 %v253, %v252
    %v269 = vpack.c.b16 %v255, %v254
    %v270 = vpack.c.b16 %v257, %v256
    %v271 = vpack.c.b16 %v259, %v258
    %v272 = vpack.c.b16 %v261, %v260
    %v273 = vpack.c.b16 %v263, %v262
    %v274 = vpack.c.b16 %v265, %v264
    %v275 = vpack.c.b16 %v267, %v266
    %284 = vmatpush.bf16.msra.mxu0 %v275
    %285 = vmatpush.bf16.msra.mxu0 %v274
    %286 = vmatpush.bf16.msra.mxu0 %v273
    %287 = vmatpush.bf16.msra.mxu0 %v272
    %288 = vmatpush.bf16.msra.mxu0 %v271
    %289 = vmatpush.bf16.msra.mxu0 %v270
    %290 = vmatpush.bf16.msra.mxu0 %v269
    %291 = vmatpush.bf16.msra.mxu0 %v268
    %292 = vmatmul.bf16.gmra.mxu0 %v215
    %v293 = vpop.f32.mrf.mxu0
    %v294 = vadd.f32 %v234, %v293
    %v295 = vpop.f32.mrf.mxu0
    %296 = vdwg.mxu0
    %v297 = vmax.f32 %v294, 0.0
    %v298 = vpack.c.bf16 %v297, %v297
    %v299 = vld [vmem:[#allocation8] sm:$0xf]
    %v300 = vld [vmem:[#allocation8 + $0x4] sm:$0xf]
    %v301 = vld [vmem:[#allocation8 + $0x8] sm:$0xf]
    %v302 = vld [vmem:[#allocation8 + $0xc] sm:$0xf]
    %v303 = vld [vmem:[#allocation8 + $0x10] sm:$0xf]
    %v304 = vld [vmem:[#allocation8 + $0x14] sm:$0xf]
    %v305 = vld [vmem:[#allocation8 + $0x18] sm:$0xf]
    %v306 = vld [vmem:[#allocation8 + $0x1c] sm:$0xf]
    %v307 = vld [vmem:[#allocation8 + $0x20] sm:$0xf]
    %v308 = vld [vmem:[#allocation8 + $0x24] sm:$0xf]
    %v309 = vld [vmem:[#allocation8 + $0x28] sm:$0xf]
    %v310 = vld [vmem:[#allocation8 + $0x2c] sm:$0xf]
    %v311 = vld [vmem:[#allocation8 + $0x30] sm:$0xf]
    %v312 = vld [vmem:[#allocation8 + $0x34] sm:$0xf]
    %v313 = vld [vmem:[#allocation8 + $0x38] sm:$0xf]
    %v314 = vld [vmem:[#allocation8 + $0x3c] sm:$0xf]
    %v315 = vld [vmem:[%s5] sm:$0x1]
    %v317 = vperm.slane %v315, 0
    %v335 = vunpack.c.l.b16 %v299
    %v336 = vunpack.c.l.b16 %v300
    %v337 = vunpack.c.l.b16 %v301
    %v338 = vunpack.c.l.b16 %v302
    %v339 = vunpack.c.l.b16 %v303
    %v340 = vunpack.c.l.b16 %v304
    %v341 = vunpack.c.l.b16 %v305
    %v342 = vunpack.c.l.b16 %v306
    %v343 = vunpack.c.l.b16 %v307
    %v344 = vunpack.c.l.b16 %v308
    %v345 = vunpack.c.l.b16 %v309
    %v346 = vunpack.c.l.b16 %v310
    %v347 = vunpack.c.l.b16 %v311
    %v348 = vunpack.c.l.b16 %v312
    %v349 = vunpack.c.l.b16 %v313
    %v350 = vunpack.c.l.b16 %v314
    %v351 = vpack.c.b16 %v336, %v335
    %v352 = vpack.c.b16 %v338, %v337
    %v353 = vpack.c.b16 %v340, %v339
    %v354 = vpack.c.b16 %v342, %v341
    %v355 = vpack.c.b16 %v344, %v343
    %v356 = vpack.c.b16 %v346, %v345
    %v357 = vpack.c.b16 %v348, %v347
    %v358 = vpack.c.b16 %v350, %v349
    %367 = vmatpush.bf16.msra.mxu0 %v358
    %368 = vmatpush.bf16.msra.mxu0 %v357
    %369 = vmatpush.bf16.msra.mxu0 %v356
    %370 = vmatpush.bf16.msra.mxu0 %v355
    %371 = vmatpush.bf16.msra.mxu0 %v354
    %372 = vmatpush.bf16.msra.mxu0 %v353
    %373 = vmatpush.bf16.msra.mxu0 %v352
    %374 = vmatpush.bf16.msra.mxu0 %v351
    %375 = vmatmul.bf16.gmra.mxu0 %v298
    %v376 = vpop.f32.mrf.mxu0
    %v377 = vadd.f32 %v317, %v376
    %v378 = vpop.f32.mrf.mxu0
    %379 = vdwg.mxu0
    %380 = vst [vmem:[#allocation10] sm:$0xff] %v377
    // Predicated region
    $region42: #{tpu_custom_call.1} parent=1 // pred_check
      _
    $region43: #{tpu_custom_call.1} parent=1 // pred_check_branch
      %382 = sbr.rel (0) target = $region45
    $region44: #{tpu_custom_call.1} parent=1 // pred_region
      %384 = vsyncadd [#allocation4], 0
      %s386 = sshll.u32 [#allocation10], 4
      %s387 = int_to_ptr.vmem [resolvable:$true] %s386
      %s388 = sshll.u32 %s6, 4
      %s389 = int_to_ptr.hbm [resolvable:$true] %s388
      %391 = dma.vmem_to_hbm [thread:$0]  %s387, 128, %s389, [#allocation4]
    $region45: #{tpu_custom_call.1} parent=1 // pred_fallthru
      _
    // Predicated region
    $region46: #{tpu_custom_call.1} parent=1 // pred_check
      _
    $region47: #{tpu_custom_call.1} parent=1 // pred_check_branch
      %393 = sbr.rel (0) target = $region49
    $region48: #{tpu_custom_call.1} parent=1 // pred_region
      %395 = dma.done [#allocation4], 128
    $region49: #{tpu_custom_call.1} parent=1 // pred_fallthru
      _
    %396 = vsyncpa [#allocation3], 1
    %397 = vsyncpa [#allocation6], 1
    %398 = vsyncpa [#allocation9], 1
    %399 = vsyncpa [#allocation4], 1

</llo_original>
